<compile_context>
chip_gen: v7x
topology: tpu7x:2x2x1
jax: 0.10.0
libtpu: 0.0.40
codegen_flags: <defaults>
</compile_context>

<pallas_src>
import math
import numpy as np

import jax
import jax.numpy as jnp
from jax.experimental import pallas as pl
from jax.experimental.pallas import tpu as pltpu

SIZES = (1, 2, 3, 6)
S_TOT = sum(s * s for s in SIZES)          # 50 pooled positions across scales


def _round_up(x, m):
    return ((x + m - 1) // m) * m


# pooled positions + 1 reserved bias row, rounded to 64 (bf16 packing-friendly)
S_PAD = _round_up(S_TOT + 1, 64)           # 64


# ----------------------------------------------------------------------------
# static coefficient builders (glue, numpy)
# ----------------------------------------------------------------------------
def _adaptive_pool_matrix(L, s):
    """(s, L) matrix implementing PyTorch AdaptiveAvgPool1d semantics."""
    M = np.zeros((s, L), np.float32)
    for i in range(s):
        start = (i * L) // s
        end = -(-((i + 1) * L) // s)        # ceil
        M[i, start:end] = 1.0 / (end - start)
    return M


def _bilinear_matrix(L_out, s_in):
    """(L_out, s_in) matrix: F.interpolate bilinear, align_corners=False."""
    M = np.zeros((L_out, s_in), np.float32)
    scale = s_in / L_out
    for o in range(L_out):
        src = (o + 0.5) * scale - 0.5
        if src < 0.0:
            src = 0.0
        i0 = min(int(math.floor(src)), s_in - 1)
        i1 = min(i0 + 1, s_in - 1)
        lam = src - i0
        M[o, i0] += 1.0 - lam
        M[o, i1] += lam
    return M


def _build_coeff_matrices(H, W, hw_pad):
    """C-major coefficient matrices:
       P_T (hw_pad, S_PAD): pooled^T = x (C, HW) @ P_T
       U_T (S_PAD, hw_pad): upsample^T; row S_PAD-1 is all-ones (bias carrier).
       Padding rows/cols are zero so padded pixels / unused rows contribute 0."""
    HW = H * W
    P_T = np.zeros((hw_pad, S_PAD), np.float32)
    U_T = np.zeros((S_PAD, hw_pad), np.float32)
    off = 0
    for s in SIZES:
        pool2d = np.kron(_adaptive_pool_matrix(H, s), _adaptive_pool_matrix(W, s))
        up2d = np.kron(_bilinear_matrix(H, s), _bilinear_matrix(W, s))
        P_T[:HW, off:off + s * s] = pool2d.T
        U_T[off:off + s * s, :HW] = up2d.T
        off += s * s
    U_T[S_PAD - 1, :HW] = 1.0               # pairs with the bias column of q^T
    return P_T, U_T


# ----------------------------------------------------------------------------
# generation-aware sizing helpers
# ----------------------------------------------------------------------------
def _vmem_capacity():
    """Physical VMEM bytes for the local chip (fallback: 128 MiB = v5e/v6e)."""
    try:
        return int(pltpu.get_tpu_info().vmem_capacity_bytes)
    except Exception:
        return 128 << 20


def _vmem_limit(block_bytes, cap):
    """Scoped-VMEM request: double-buffered blocks + margin, clamped below the
    physical capacity (keeps v7x's 64 MiB honest)."""
    need = sum(2 * b for b in block_bytes) + (4 << 20)
    hard = cap - (8 << 20)
    return int(max(16 << 20, min(need, hard)))


def _pick_tiling(HW, C, F_pad, cap):
    """Pixel tile PT (lane dim, multiple of 128), padded pixel count, tile
    count, and the kernel-1 split-K factor (2 only when it adds no padding)."""
    target = 1024 if cap <= (80 << 20) else 2048      # v7x vs v5e/v6e
    PT = min(_round_up(HW, 128), target)
    budget = max(cap // 3, 24 << 20)
    # keep kernel-2 double-buffered streaming blocks (x, U^T, y^T; bf16) in budget
    while PT > 256 and 4 * PT * (C + S_PAD + F_pad) > budget:
        PT = max(256, _round_up(PT // 2, 128))
    # avoid excessive last-tile padding (> ~25% wasted pixels)
    while PT > 256 and (_round_up(HW, PT) - HW) * 4 > HW:
        PT = max(256, _round_up(PT // 2, 128))
    n_tiles = -(-HW // PT)
    n_split = 2 if (n_tiles >= 2 and n_tiles % 2 == 0) else 1
    return PT, n_tiles * PT, n_tiles, n_split, n_tiles // n_split


def _const_spec(block_shape, index_map):
    """BlockSpec for a grid-(near-)constant operand; single-buffered when the
    installed Pallas supports pipeline_mode, otherwise a plain BlockSpec."""
    if hasattr(pl, "Buffered"):
        try:
            return pl.BlockSpec(block_shape, index_map,
                                pipeline_mode=pl.Buffered(1))
        except Exception:
            pass
    return pl.BlockSpec(block_shape, index_map)


# ----------------------------------------------------------------------------
# Pallas kernels
# ----------------------------------------------------------------------------
def _pool_kernel(x_ref, pt_ref, o_ref):
    """pooled^T (C, S_PAD) += x_tile (C, PT) @ P^T_tile (PT, S_PAD).
    The pixel axis (last grid dim) is a reduction; the f32 output block is the
    accumulator (resident across the reduction axis)."""
    @pl.when(pl.program_id(2) == 0)
    def _init():
        o_ref[...] = jnp.zeros_like(o_ref)

    o_ref[0, 0] += jnp.dot(x_ref[0], pt_ref[...],
                           preferred_element_type=jnp.float32)


def _bottleneck_kernel(x_ref, ut_ref, q_ref, wxt_ref, o_ref):
    """y^T (F_pad, PT) = Wx^T @ x_tile + q^T @ U^T_tile  (bias rides in the
    last q column / ones row of U^T), then ReLU; lane-dense bf16 store."""
    y = jnp.dot(wxt_ref[...], x_ref[0], preferred_element_type=jnp.float32)
    y = y + jnp.dot(q_ref[0], ut_ref[...], preferred_element_type=jnp.float32)
    o_ref[0] = jnp.maximum(y, 0.0).astype(o_ref.dtype)


# ----------------------------------------------------------------------------
# wrapper
# ----------------------------------------------------------------------------
def psp_module_forward(feats_nchw, params):
    N, C, H, W = feats_nchw.shape
    F_out = params["b_bottleneck"].shape[-1]
    HW = H * W

    cap = _vmem_capacity()
    F_pad = _round_up(F_out, 128)
    PT, HW_pad, n_tiles, n_split, kps = _pick_tiling(HW, C, F_pad, cap)

    # --- NCHW-native operand: (N, C, H, W) -> (N, C, HW_pad) bf16, no transposes
    x = feats_nchw.reshape(N, C, HW).astype(jnp.bfloat16)
    if HW_pad != HW:
        x = jnp.pad(x, ((0, 0), (0, 0), (0, HW_pad - HW)))

    P_T_np, U_T_np = _build_coeff_matrices(H, W, HW_pad)
    P_T = jnp.asarray(P_T_np, jnp.bfloat16)          # (HW_pad, S_PAD)
    U_T = jnp.asarray(U_T_np, jnp.bfloat16)          # (S_PAD, HW_pad)

    # ------------------------------------------------------------------
    # kernel 1: pooled^T[n] = x[n] @ P^T  — pixel tiles as a reduction axis,
    # split in two when free so both v7x TensorCores contribute.
    # ------------------------------------------------------------------
    k1_vmem = _vmem_limit([C * PT * 2, PT * S_PAD * 2, C * S_PAD * 4], cap)
    pooled_parts = pl.pallas_call(
        _pool_kernel,
        out_shape=jax.ShapeDtypeStruct((n_split, N, C, S_PAD), jnp.float32),
        grid_spec=pltpu.PrefetchScalarGridSpec(
            num_scalar_prefetch=0,
            grid=(n_split, N, kps),
            in_specs=[
                pl.BlockSpec((1, C, PT), lambda s, n, k: (n, 0, s * kps + k)),
                pl.BlockSpec((PT, S_PAD), lambda s, n, k: (s * kps + k, 0)),
            ],
            out_specs=pl.BlockSpec((1, 1, C, S_PAD),
                                   lambda s, n, k: (s, n, 0, 0)),
        ),
        compiler_params=pltpu.CompilerParams(
            dimension_semantics=("parallel", "parallel", "arbitrary"),
            vmem_limit_bytes=k1_vmem),
    )(x, P_T)
    pooledT = jnp.sum(pooled_parts, axis=0)          # (N, C, S_PAD) f32, tiny

    # ------------------------------------------------------------------
    # fold (XLA, tiny): stage conv folded into its bottleneck block and
    # applied to pooled^T; bias appended as the last q^T column.
    # ------------------------------------------------------------------
    hp = jax.lax.Precision.HIGHEST
    Wb = params["w_bottleneck"].astype(jnp.float32)                  # (5C, F_out)
    bias = params["b_bottleneck"].reshape(-1).astype(jnp.float32)    # (F_out,)
    q_blocks, off = [], 0
    for i, s in enumerate(SIZES):
        G_s = jnp.matmul(params[f"w_stage_{s}"].astype(jnp.float32),
                         Wb[i * C:(i + 1) * C], precision=hp)        # (C, F_out)
        q_blocks.append(jnp.einsum("ncs,cf->nfs",
                                   pooledT[:, :, off:off + s * s], G_s,
                                   precision=hp))
        off += s * s
    qT = jnp.concatenate(
        q_blocks
        + [jnp.zeros((N, F_out, S_PAD - 1 - S_TOT), jnp.float32),
           jnp.broadcast_to(bias[None, :, None], (N, F_out, 1))], axis=-1)
    qT = jnp.pad(qT, ((0, 0), (0, F_pad - F_out), (0, 0))).astype(jnp.bfloat16)
    WxT = jnp.pad(Wb[len(SIZES) * C:].T,
                  ((0, F_pad - F_out), (0, 0))).astype(jnp.bfloat16)  # (F_pad, C)

    # ------------------------------------------------------------------
    # kernel 2: y^T = Wx^T @ x + q^T @ U^T, ReLU — bf16, lane-dense PT output.
    # ------------------------------------------------------------------
    k2_vmem = _vmem_limit(
        [C * PT * 2, S_PAD * PT * 2, F_pad * PT * 2,
         F_pad * S_PAD * 2, F_pad * C * 2], cap)
    out_T = pl.pallas_call(
        _bottleneck_kernel,
        out_shape=jax.ShapeDtypeStruct((N, F_pad, HW_pad), jnp.bfloat16),
        grid_spec=pltpu.PrefetchScalarGridSpec(
            num_scalar_prefetch=0,
            grid=(N, n_tiles),
            in_specs=[
                pl.BlockSpec((1, C, PT), lambda n, t: (n, 0, t)),
                pl.BlockSpec((S_PAD, PT), lambda n, t: (0, t)),
                _const_spec((1, F_pad, S_PAD), lambda n, t: (n, 0, 0)),
                _const_spec((F_pad, C), lambda n, t: (0, 0)),
            ],
            out_specs=pl.BlockSpec((1, F_pad, PT), lambda n, t: (n, 0, t)),
        ),
        compiler_params=pltpu.CompilerParams(
            dimension_semantics=("parallel", "parallel"),
            vmem_limit_bytes=k2_vmem),
    )(x, U_T, qT, WxT)

    # strip padding (reshape over contiguous HW is free) and restore f32.
    out = out_T[:, :F_out, :HW].astype(jnp.float32)
    return out.reshape(N, F_out, H, W)


# ----------------------------------------------------------------------------
# deterministic parameter init (synthetic, matches module shapes)
# ----------------------------------------------------------------------------
def init_params(key, C, F_out):
    keys = jax.random.split(key, len(SIZES) + 2)
    params = {}
    for k, s in zip(keys[: len(SIZES)], SIZES):
        # stage Conv2d(C, C, 1, bias=False) weight, stored as (C_in, C_out)
        params[f"w_stage_{s}"] = jax.random.normal(k, (C, C), jnp.float32) / math.sqrt(C)
    cin = (len(SIZES) + 1) * C
    # bottleneck Conv2d(5C, F_out, 1) weight (C_in, C_out) and bias
    params["w_bottleneck"] = jax.random.normal(keys[-2], (cin, F_out), jnp.float32) / math.sqrt(cin)
    params["b_bottleneck"] = 0.1 * jax.random.normal(keys[-1], (1, F_out), jnp.float32)
    return params


# ----------------------------------------------------------------------------
# independent numpy reference (PyTorch semantics)
# ----------------------------------------------------------------------------
def reference_forward(x_nchw, params):
    x = np.asarray(x_nchw, np.float64)
    N, C, H, W = x.shape
    priors = []
    for s in SIZES:
        pooled = np.zeros((N, C, s, s), np.float64)
        for i in range(s):
            h0, h1 = (i * H) // s, -(-((i + 1) * H) // s)
            for j in range(s):
                w0, w1 = (j * W) // s, -(-((j + 1) * W) // s)
                pooled[:, :, i, j] = x[:, :, h0:h1, w0:w1].mean(axis=(2, 3))
        Wst = np.asarray(params[f"w_stage_{s}"], np.float64)            # (C_in, C_out)
        conv = np.einsum("ncij,cd->ndij", pooled, Wst)
        Uy = _bilinear_matrix(H, s).astype(np.float64)
        Ux = _bilinear_matrix(W, s).astype(np.float64)
        up = np.einsum("hi,ndij,wj->ndhw", Uy, conv, Ux)
        priors.append(up)
    priors.append(x)
    cat = np.concatenate(priors, axis=1)                                 # (N, 5C, H, W)
    Wb = np.asarray(params["w_bottleneck"], np.float64)                  # (5C, F)
    b = np.asarray(params["b_bottleneck"], np.float64).reshape(-1)
    y = np.einsum("nchw,cf->nfhw", cat, Wb) + b[None, :, None, None]
    return np.maximum(y, 0.0)


if __name__ == "__main__":
    key = jax.random.PRNGKey(0)
    kx, kp = jax.random.split(key)

    N, C, H, W = 2, 4, 16, 16   # small shapes; features = C
    F_out = 32                  # small out_features for the synthetic test

    feats = jax.random.normal(kx, (N, C, H, W), jnp.float32)
    params = init_params(kp, C, F_out)

    out = psp_module_forward(feats, params)
    out = jax.block_until_ready(out)
    assert out.shape == (N, F_out, H, W)

    ref = reference_forward(np.asarray(feats),
                            {k: np.asarray(v) for k, v in params.items()})
    # bf16 MXU operands + bf16 output store, f32 accumulation everywhere
    np.testing.assert_allclose(np.asarray(out), ref, rtol=4e-2, atol=4e-2)

    print("KERNEL_OK")
</pallas_src>

<mosaic_0001>
module attributes {stable_mosaic.version = 11 : i64} {
  func.func @_pool_kernel(%arg0: i32, %arg1: i32, %arg2: i32, %arg3: memref<1x4x256xbf16, #tpu.memory_space<vmem>>, %arg4: memref<256x64xbf16, #tpu.memory_space<vmem>>, %arg5: memref<1x1x4x64xf32, #tpu.memory_space<vmem>>) attributes {dimension_semantics = [#tpu.dimension_semantics<parallel>, #tpu.dimension_semantics<parallel>, #tpu.dimension_semantics<arbitrary>], iteration_bounds = array<i64: 1, 2, 1>, scalar_prefetch = 0 : i64, scratch_operands = 0 : i64, tpu.core_type = #tpu.core_type<tc>, window_params = [{transform_indices = @transform_0, window_bounds = array<i64: 1, 4, 256>}, {transform_indices = @transform_1, window_bounds = array<i64: 256, 64>}, {transform_indices = @transform_2, window_bounds = array<i64: 1, 1, 4, 64>}]} {
    %c0_i32 = arith.constant 0 : i32
    %0 = arith.cmpi eq, %arg2, %c0_i32 : i32
    %1 = arith.extui %0 : i1 to i32
    %c0_i32_0 = arith.constant 0 : i32
    %2 = arith.cmpi ne, %1, %c0_i32_0 : i32
    scf.if %2 {
      %cst_13 = arith.constant 0.000000e+00 : f32
      %13 = vector.broadcast %cst_13 : f32 to vector<1x1x4x64xf32>
      %c0_14 = arith.constant 0 : index
      %c0_15 = arith.constant 0 : index
      %c0_16 = arith.constant 0 : index
      %c0_17 = arith.constant 0 : index
      %14 = vector.load %arg5[%c0_14, %c0_15, %c0_16, %c0_17] : memref<1x1x4x64xf32, #tpu.memory_space<vmem>>, vector<1x1x4x64xf32>
      tpu.vector_store %arg5[%c0_14, %c0_15, %c0_16, %c0_17], %13 {strides = array<i32>} : memref<1x1x4x64xf32, #tpu.memory_space<vmem>>, vector<1x1x4x64xf32>,
    } else {
    }
    %c0 = arith.constant 0 : index
    %c0_1 = arith.constant 0 : index
    %c0_2 = arith.constant 0 : index
    %c0_3 = arith.constant 0 : index
    %3 = vector.load %arg5[%c0, %c0_1, %c0_2, %c0_3] : memref<1x1x4x64xf32, #tpu.memory_space<vmem>>, vector<1x1x4x64xf32>
    %4 = vector.shape_cast %3 : vector<1x1x4x64xf32> to vector<4x64xf32>
    %c0_4 = arith.constant 0 : index
    %c0_5 = arith.constant 0 : index
    %c0_6 = arith.constant 0 : index
    %5 = vector.load %arg3[%c0_4, %c0_5, %c0_6] : memref<1x4x256xbf16, #tpu.memory_space<vmem>>, vector<1x4x256xbf16>
    %6 = vector.shape_cast %5 : vector<1x4x256xbf16> to vector<4x256xbf16>
    %c0_7 = arith.constant 0 : index
    %c0_8 = arith.constant 0 : index
    %7 = vector.load %arg4[%c0_7, %c0_8] : memref<256x64xbf16, #tpu.memory_space<vmem>>, vector<256x64xbf16>
    %cst = arith.constant dense<0.000000e+00> : vector<4x64xf32>
    %8 = tpu.matmul %6, %7, %cst {dimension_numbers = #tpu.dot_dimension_numbers<[1], [0], [0], [1], [0, 0, 1, 1], [], []>} : vector<4x256xbf16>, vector<256x64xbf16>, vector<4x64xf32> -> vector<4x64xf32>
    %9 = arith.addf %4, %8 : vector<4x64xf32>
    %c0_9 = arith.constant 0 : index
    %c0_10 = arith.constant 0 : index
    %c0_11 = arith.constant 0 : index
    %c0_12 = arith.constant 0 : index
    %10 = vector.load %arg5[%c0_9, %c0_10, %c0_11, %c0_12] : memref<1x1x4x64xf32, #tpu.memory_space<vmem>>, vector<1x1x4x64xf32>
    %11 = vector.shape_cast %10 : vector<1x1x4x64xf32> to vector<4x64xf32>
    %12 = vector.shape_cast %9 : vector<4x64xf32> to vector<1x1x4x64xf32>
    tpu.vector_store %arg5[%c0_9, %c0_10, %c0_11, %c0_12], %12 {strides = array<i32>} : memref<1x1x4x64xf32, #tpu.memory_space<vmem>>, vector<1x1x4x64xf32>,
    return
  }
  func.func @transform_0(%arg0: i32, %arg1: i32, %arg2: i32) -> (i32, i32, i32) {
    %c1_i32 = arith.constant 1 : i32
    %0 = arith.muli %arg0, %c1_i32 : i32
    %1 = arith.addi %0, %arg2 : i32
    %c0_i32 = arith.constant 0 : i32
    %c0_i32_0 = arith.constant 0 : i32
    return %arg1, %c0_i32, %1 : i32, i32, i32
  }
  func.func @transform_1(%arg0: i32, %arg1: i32, %arg2: i32) -> (i32, i32) {
    %c1_i32 = arith.constant 1 : i32
    %0 = arith.muli %arg0, %c1_i32 : i32
    %1 = arith.addi %0, %arg2 : i32
    %c0_i32 = arith.constant 0 : i32
    %c0_i32_0 = arith.constant 0 : i32
    return %1, %c0_i32 : i32, i32
  }
  func.func @transform_2(%arg0: i32, %arg1: i32, %arg2: i32) -> (i32, i32, i32, i32) {
    %c0_i32 = arith.constant 0 : i32
    %c0_i32_0 = arith.constant 0 : i32
    %c0_i32_1 = arith.constant 0 : i32
    return %arg0, %arg1, %c0_i32, %c0_i32_0 : i32, i32, i32, i32
  }
}

</mosaic_0001>

<llo_original>
// kernel: tpu_custom_call.1
$region0: #{tpu_custom_call.1}
  #allocation0 [shape = 'u32[]', space=smem, size = 0x4, offset = 0x4, fixed_abs, tag = 'smem constant byte address 0x4 - core index']
  #allocation1 [shape = 'u32[144,128]{1,0:T(1,128)}', space=vmem, size = 0x12000, scoped, tag = 'internal scratch']
  %s0 = inlined_call_operand.vmem [shape: bf16[2,4,256], index: 0, kind: input, shape index: {}]
  %s1 = inlined_call_operand.vmem [shape: bf16[256,64], index: 1, kind: input, shape index: {}]
  %s2 = inlined_call_operand.hbm [shape: f32[1,2,4,64], index: 2, kind: output, shape index: {}]
  %s3 = sld [smem:[#allocation0]]
  $region45: #{tpu_custom_call.1} parent=0
    _
  %s5 = ssub.s32 1, %s3
  %s6 = scalar_select 0, %s5, %s3
  $region1: #{tpu_custom_call.1} parent=0
    #allocation2 [shape = 'u8[4096]{0}', space=vmem, size = 0x1000, scoped, tag = 'output window, operand 0']
    #allocation3 [shape = 's32[2]{0}', space=sflag, size = 0x8, scoped, tag = 'scoped memory for tpu_custom_call.1']
    %7 = vsyncpa [#allocation3], 0
    %s8 = scalar_lea.sflag [#allocation3], 1
    %9 = vsyncpa %s8, 0
    loop: start=0, step=1, limit=4
    $region2: #{tpu_custom_call.1} parent=1 // loop_pre_header
      _
    $region3: #{tpu_custom_call.1} parent=1 // loop_header
      %s11 = sphi 0, %s15
      %p12 = scmp.ge.s32.totalorder %s11, 4
      %s18 = sphi 0, %s37
      %s19 = sphi 0, %s33
      %s20 = sphi 0, %s29
      %s21 = sphi 0, %s18
      %s22 = sphi 0, %s19
      %s23 = sphi 0, %s20
      %s24 = sphi 0, %s21
      %s25 = sphi 0, %s22
      %s26 = sphi 0, %s23
      %s44 = sphi 0, %s46
      %s47 = sphi 0, %s44
      %s48 = sphi 0, %s47
      %s64 = sphi 0, %s48
      %s72 = sphi 0, %s74
      %s75 = sphi 0, %s72
      %s76 = sphi 0, %s75
      %s92 = sphi 0, %s76
      %s100 = sphi 0, %s102
      %s103 = sphi 0, %s100
      %s104 = sphi 0, %s103
      %s120 = sphi 0, %s104
    $region4: #{tpu_custom_call.1} parent=1 // loop_header_branch
      %14 = sbr.rel (%p12) target = $region8
    $region5: #{tpu_custom_call.1} parent=1 // loop_body
      %s16 = ssub.s32 %s11, 1
      %s17 = ssub.s32 %s11, 2
      %s27 = sadd.s32 1, %s20
      %p28 = scmp.ge.s32.totalorder %s27, 1
      %s29 = scalar_select %p28, 0, %s27
      %s30 = sadd.s32 1, %s19
      %s31 = scalar_select %p28, %s30, %s19
      %p32 = scmp.ge.s32.totalorder %s31, 2
      %s33 = scalar_select %p32, 0, %s31
      %s34 = sadd.s32 1, %s18
      %s35 = scalar_select %p32, %s34, %s18
      %p36 = scmp.ge.s32.totalorder %s35, 1
      %s37 = scalar_select %p36, 0, %s35
      %s38 = sadd.s32 %s18, %s20
      %s39 = sadd.s32 %s37, %s29
      %s40 = ssub.s32 %s19, %s33
      %s41 = ssub.s32 %s38, %s39
      %s42 = sor.u32 %s40, %s41
      %p43 = scmp.eq.s32.totalorder %s42, 0
      %s45 = sadd.s32 %s44, 1
      %s46 = scalar_select %p43, %s44, %s45
      %p49 = pneg %p43
      %p50 = scmp.eq.s32.totalorder %s11, 1
      %p51 = por %p49, %p50
      %p52 = scmp.ne.s32.totalorder %s44, %s47
      %p53 = scmp.eq.s32.totalorder %s11, 0
      %p54 = por %p52, %p53
      %p55 = scmp.ne.s32.totalorder %s44, %s47
      %p56 = scmp.eq.s32.totalorder %s16, 1
      %p57 = por %p55, %p56
      %p58 = scmp.ne.s32.totalorder %s47, %s48
      %p59 = scmp.eq.s32.totalorder %s16, 0
      %p60 = por %p58, %p59
      %p61 = scmp.ne.s32.totalorder %s47, %s48
      %p62 = scmp.eq.s32.totalorder %s17, 1
      %p63 = por %p61, %p62
      %p65 = scmp.ne.s32.totalorder %s48, %s64
      %p66 = scmp.eq.s32.totalorder %s17, 0
      %p67 = por %p65, %p66
      %s68 = sadd.s32 %s18, %s20
      %s69 = sadd.s32 %s37, %s29
      %s70 = ssub.s32 %s68, %s69
      %p71 = scmp.eq.s32.totalorder %s70, 0
      %s73 = sadd.s32 %s72, 1
      %s74 = scalar_select %p71, %s72, %s73
      %p77 = pneg %p71
      %p78 = scmp.eq.s32.totalorder %s11, 1
      %p79 = por %p77, %p78
      %p80 = scmp.ne.s32.totalorder %s72, %s75
      %p81 = scmp.eq.s32.totalorder %s11, 0
      %p82 = por %p80, %p81
      %p83 = scmp.ne.s32.totalorder %s72, %s75
      %p84 = scmp.eq.s32.totalorder %s16, 1
      %p85 = por %p83, %p84
      %p86 = scmp.ne.s32.totalorder %s75, %s76
      %p87 = scmp.eq.s32.totalorder %s16, 0
      %p88 = por %p86, %p87
      %p89 = scmp.ne.s32.totalorder %s75, %s76
      %p90 = scmp.eq.s32.totalorder %s17, 1
      %p91 = por %p89, %p90
      %p93 = scmp.ne.s32.totalorder %s76, %s92
      %p94 = scmp.eq.s32.totalorder %s17, 0
      %p95 = por %p93, %p94
      %s96 = ssub.s32 %s18, %s37
      %s97 = ssub.s32 %s19, %s33
      %s98 = sor.u32 %s96, %s97
      %p99 = scmp.eq.s32.totalorder %s98, 0
      %s101 = sadd.s32 %s100, 1
      %s102 = scalar_select %p99, %s100, %s101
      %p105 = pneg %p99
      %p106 = scmp.eq.s32.totalorder %s11, 1
      %p107 = por %p105, %p106
      %p108 = scmp.ne.s32.totalorder %s100, %s103
      %p109 = scmp.eq.s32.totalorder %s11, 0
      %p110 = por %p108, %p109
      %p111 = scmp.ne.s32.totalorder %s100, %s103
      %p112 = scmp.eq.s32.totalorder %s16, 1
      %p113 = por %p111, %p112
      %p114 = scmp.ne.s32.totalorder %s103, %s104
      %p115 = scmp.eq.s32.totalorder %s16, 0
      %p116 = por %p114, %p115
      %p117 = scmp.ne.s32.totalorder %s103, %s104
      %p118 = scmp.eq.s32.totalorder %s17, 1
      %p119 = por %p117, %p118
      %p121 = scmp.ne.s32.totalorder %s104, %s120
      %p122 = scmp.eq.s32.totalorder %s17, 0
      %p123 = por %p121, %p122
      %p124 = scmp.le.s32.totalorder 1, %s11
      %p125 = scmp.lt.s32.totalorder %s11, 3
      %p126 = pnand %p124, %p125
      %p127 = pneg %p126
      // Predicated region
      $region9: #{tpu_custom_call.1} parent=5 // pred_check
        _
      $region10: #{tpu_custom_call.1} parent=5 // pred_check_branch
        %129 = sbr.rel (%p126) target = $region12
      $region11: #{tpu_custom_call.1} parent=5 // pred_region
        %s130 = ssub.s32 %s11, 1
        // Predicated region
        $region13: #{tpu_custom_call.1} parent=11 // pred_check
          %p131 = pneg %p88
        $region14: #{tpu_custom_call.1} parent=11 // pred_check_branch
          %133 = sbr.rel (%p131) target = $region16
        $region15: #{tpu_custom_call.1} parent=11 // pred_region
          %s134 = sadd.s32 %s21, %s23
          %s135 = smul.u32 32, %s134
          %p136 = scmp.lt.s32.totalorder %s135, 31
          %s137 = scalar_select %p136, %s135, 31
          %s138 = smul.addr %s137, 4
          %s139 = scalar_lea.vmem %s1, %s138
          %s140 = sadd.s32 %s21, %s23
          %s141 = smul.u32 32, %s140
        $region16: #{tpu_custom_call.1} parent=11 // pred_fallthru
          _
      $region12: #{tpu_custom_call.1} parent=5 // pred_fallthru
        _
      %p142 = scmp.lt.s32.totalorder %s11, 2
      // Predicated region
      $region17: #{tpu_custom_call.1} parent=5 // pred_check
        %p143 = pneg %p142
      $region18: #{tpu_custom_call.1} parent=5 // pred_check_branch
        %145 = sbr.rel (%p143) target = $region20
      $region19: #{tpu_custom_call.1} parent=5 // pred_region
        // Predicated region
        $region21: #{tpu_custom_call.1} parent=19 // pred_check
          %p146 = pneg %p54
        $region22: #{tpu_custom_call.1} parent=19 // pred_check_branch
          %148 = sbr.rel (%p146) target = $region24
        $region23: #{tpu_custom_call.1} parent=19 // pred_region
          %s149 = sadd.s32 %s18, %s20
          %s150 = smul.u32 2, %s149
          %p151 = scmp.lt.s32.totalorder %s19, 1
          %s152 = scalar_select %p151, %s19, 1
          %p153 = scmp.lt.s32.totalorder %s150, 1
          %s154 = scalar_select %p153, %s150, 1
          %s155 = smul.addr %s152, 2
          %s156 = sadd.s32 %s154, %s155
          %s157 = smul.addr %s156, 2
          %s158 = scalar_lea.vmem %s0, %s157
          %s159 = sadd.s32 %s18, %s20
          %s160 = smul.u32 2, %s159
        $region24: #{tpu_custom_call.1} parent=19 // pred_fallthru
          _
      $region20: #{tpu_custom_call.1} parent=5 // pred_fallthru
        _
      %p161 = scmp.le.s32.totalorder 1, %s11
      %p162 = scmp.lt.s32.totalorder %s11, 3
      %p163 = pnand %p161, %p162
      %p164 = pneg %p163
      // Predicated region
      $region25: #{tpu_custom_call.1} parent=5 // pred_check
        _
      $region26: #{tpu_custom_call.1} parent=5 // pred_check_branch
        %166 = sbr.rel (%p163) target = $region28
      $region27: #{tpu_custom_call.1} parent=5 // pred_region
        %s167 = ssub.s32 %s11, 1
        %s168 = sadd.s32 %s21, %s23
        %s169 = smul.u32 2, %s168
        %p170 = scmp.lt.s32.totalorder %s22, 1
        %s171 = scalar_select %p170, %s22, 1
        %p172 = scmp.lt.s32.totalorder %s169, 1
        %s173 = scalar_select %p172, %s169, 1
        %s174 = smul.addr %s171, 2
        %s175 = sadd.s32 %s173, %s174
        %s176 = smul.addr %s175, 2
        %s177 = scalar_lea.vmem %s0, %s176
        %p178 = pneg %p60
        %p179 = pneg %p57
        %s180 = sadd.s32 %s21, %s23
        %s181 = smul.u32 32, %s180
        %p182 = scmp.lt.s32.totalorder %s181, 31
        %s183 = scalar_select %p182, %s181, 31
        %s184 = smul.addr %s183, 4
        %s185 = scalar_lea.vmem %s1, %s184
        %p186 = pneg %p88
        %p187 = pneg %p85
        %p188 = pneg %p116
        %p189 = pneg %p113
        %s190 = sand.u32 %s103, 1
        %s191 = scalar_lea.sflag [#allocation3], %s190
        %s192 = sand.u32 %s103, 1
        %s193 = smul.addr %s192, 4
        %s194 = scalar_lea.vmem [#allocation2], %s193
        %s195 = sadd.s32 %s21, %s23
        %s196 = smul.u32 2, %s195
        %p197 = scmp.lt.s32.totalorder %s22, 1
        %s198 = scalar_select %p197, %s22, 1
        %p199 = scmp.lt.s32.totalorder %s196, 1
        %s200 = scalar_select %p199, %s196, 1
        %s201 = smul.addr %s198, 2
        %s202 = sadd.s32 %s200, %s201
        %s203 = smul.addr %s202, 2
        %s204 = scalar_lea.vmem %s0, %s203
        %s205 = sadd.s32 %s21, %s23
        %s206 = smul.u32 2, %s205
        %s207 = sadd.s32 %s21, %s23
        %s208 = smul.u32 32, %s207
        %p209 = scmp.lt.s32.totalorder %s208, 31
        %s210 = scalar_select %p209, %s208, 31
        %s211 = smul.addr %s210, 4
        %s212 = scalar_lea.vmem %s1, %s211
        %s213 = sadd.s32 %s21, %s23
        %s214 = smul.u32 32, %s213
        %p216 = scmp.eq.s32.totalorder %s23, 0
        // Predicated region
        $region29: #{tpu_custom_call.1} parent=27 // pred_check
          %p217 = pneg %p216
        $region30: #{tpu_custom_call.1} parent=27 // pred_check_branch
          %219 = sbr.rel (%p217) target = $region32
        $region31: #{tpu_custom_call.1} parent=27 // pred_region
          %vm220 = vcmask 519168
          %221 = vst.msk [vmem:[%s194] sm:$0xf] %vm220, 0.0
        $region32: #{tpu_custom_call.1} parent=27 // pred_fallthru
          _
        %v222 = vld [vmem:[%s194] sm:$0xf]
        %v223 = vld [vmem:[%s204] sm:$0xf]
        %v224 = vld [vmem:[%s212] sm:$0xf]
        %v225 = vld [vmem:[%s212 + $0x4] sm:$0xf]
        %v226 = vld [vmem:[%s212 + $0x8] sm:$0xf]
        %v227 = vld [vmem:[%s212 + $0xc] sm:$0xf]
        %v228 = vld [vmem:[%s212 + $0x10] sm:$0xf]
        %v229 = vld [vmem:[%s212 + $0x14] sm:$0xf]
        %v230 = vld [vmem:[%s212 + $0x18] sm:$0xf]
        %v231 = vld [vmem:[%s212 + $0x1c] sm:$0xf]
        %v232 = vld [vmem:[%s212 + $0x20] sm:$0xf]
        %v233 = vld [vmem:[%s212 + $0x24] sm:$0xf]
        %v234 = vld [vmem:[%s212 + $0x28] sm:$0xf]
        %v235 = vld [vmem:[%s212 + $0x2c] sm:$0xf]
        %v236 = vld [vmem:[%s212 + $0x30] sm:$0xf]
        %v237 = vld [vmem:[%s212 + $0x34] sm:$0xf]
        %v238 = vld [vmem:[%s212 + $0x38] sm:$0xf]
        %v239 = vld [vmem:[%s212 + $0x3c] sm:$0xf]
        %v240 = vld [vmem:[%s212 + $0x40] sm:$0xf]
        %v241 = vld [vmem:[%s212 + $0x44] sm:$0xf]
        %v242 = vld [vmem:[%s212 + $0x48] sm:$0xf]
        %v243 = vld [vmem:[%s212 + $0x4c] sm:$0xf]
        %v244 = vld [vmem:[%s212 + $0x50] sm:$0xf]
        %v245 = vld [vmem:[%s212 + $0x54] sm:$0xf]
        %v246 = vld [vmem:[%s212 + $0x58] sm:$0xf]
        %v247 = vld [vmem:[%s212 + $0x5c] sm:$0xf]
        %v248 = vld [vmem:[%s212 + $0x60] sm:$0xf]
        %v249 = vld [vmem:[%s212 + $0x64] sm:$0xf]
        %v250 = vld [vmem:[%s212 + $0x68] sm:$0xf]
        %v251 = vld [vmem:[%s212 + $0x6c] sm:$0xf]
        %v252 = vld [vmem:[%s212 + $0x70] sm:$0xf]
        %v253 = vld [vmem:[%s212 + $0x74] sm:$0xf]
        %v254 = vld [vmem:[%s212 + $0x78] sm:$0xf]
        %v255 = vld [vmem:[%s212 + $0x7c] sm:$0xf]
        %v258 = vunpack.c.l.s4 1983009808
        %v259 = vunpack.c.0.s8 %v258
        %v260 = vlaneseq
        %v261 = vshrl.u32 %v260, 7
        %v262 = vsub.s32 %v259, %v261
        %v263 = vrot.slane %v223, %v262
        %v264 = vcombine.high %v263, %v263
        %v299 = vunpack.c.l.b16 %v224
        %v300 = vunpack.c.l.b16 %v225
        %v301 = vunpack.c.l.b16 %v226
        %v302 = vunpack.c.l.b16 %v227
        %v303 = vunpack.c.l.b16 %v228
        %v304 = vunpack.c.l.b16 %v229
        %v305 = vunpack.c.l.b16 %v230
        %v306 = vunpack.c.l.b16 %v231
        %v307 = vunpack.c.l.b16 %v232
        %v308 = vunpack.c.l.b16 %v233
        %v309 = vunpack.c.l.b16 %v234
        %v310 = vunpack.c.l.b16 %v235
        %v311 = vunpack.c.l.b16 %v236
        %v312 = vunpack.c.l.b16 %v237
        %v313 = vunpack.c.l.b16 %v238
        %v314 = vunpack.c.l.b16 %v239
        %v315 = vunpack.c.l.b16 %v240
        %v316 = vunpack.c.l.b16 %v241
        %v317 = vunpack.c.l.b16 %v242
        %v318 = vunpack.c.l.b16 %v243
        %v319 = vunpack.c.l.b16 %v244
        %v320 = vunpack.c.l.b16 %v245
        %v321 = vunpack.c.l.b16 %v246
        %v322 = vunpack.c.l.b16 %v247
        %v323 = vunpack.c.l.b16 %v248
        %v324 = vunpack.c.l.b16 %v249
        %v325 = vunpack.c.l.b16 %v250
        %v326 = vunpack.c.l.b16 %v251
        %v327 = vunpack.c.l.b16 %v252
        %v328 = vunpack.c.l.b16 %v253
        %v329 = vunpack.c.l.b16 %v254
        %v330 = vunpack.c.l.b16 %v255
        %v331 = vpack.c.b16 %v300, %v299
        %v332 = vpack.c.b16 %v302, %v301
        %v333 = vpack.c.b16 %v304, %v303
        %v334 = vpack.c.b16 %v306, %v305
        %v335 = vpack.c.b16 %v308, %v307
        %v336 = vpack.c.b16 %v310, %v309
        %v337 = vpack.c.b16 %v312, %v311
        %v338 = vpack.c.b16 %v314, %v313
        %v339 = vpack.c.b16 %v316, %v315
        %v340 = vpack.c.b16 %v318, %v317
        %v341 = vpack.c.b16 %v320, %v319
        %v342 = vpack.c.b16 %v322, %v321
        %v343 = vpack.c.b16 %v324, %v323
        %v344 = vpack.c.b16 %v326, %v325
        %v345 = vpack.c.b16 %v328, %v327
        %v346 = vpack.c.b16 %v330, %v329
        %363 = vmatprep.subr.bf16.mxu0 0
        %364 = vmatpush1.bf16.msra.mxu0 %v331
        %365 = vmatprep.subr.bf16.mxu0 0
        %366 = vmatpush1.bf16.msra.mxu0 %v332
        %367 = vmatprep.subr.bf16.mxu0 0
        %368 = vmatpush1.bf16.msra.mxu0 %v333
        %369 = vmatprep.subr.bf16.mxu0 0
        %370 = vmatpush1.bf16.msra.mxu0 %v334
        %371 = vmatprep.subr.bf16.mxu0 0
        %372 = vmatpush1.bf16.msra.mxu0 %v335
        %373 = vmatprep.subr.bf16.mxu0 0
        %374 = vmatpush1.bf16.msra.mxu0 %v336
        %375 = vmatprep.subr.bf16.mxu0 0
        %376 = vmatpush1.bf16.msra.mxu0 %v337
        %377 = vmatprep.subr.bf16.mxu0 0
        %378 = vmatpush1.bf16.msra.mxu0 %v338
        %379 = vmatprep.subr.bf16.mxu0 0
        %380 = vmatpush1.bf16.msra.mxu0 %v339
        %381 = vmatprep.subr.bf16.mxu0 0
        %382 = vmatpush1.bf16.msra.mxu0 %v340
        %383 = vmatprep.subr.bf16.mxu0 0
        %384 = vmatpush1.bf16.msra.mxu0 %v341
        %385 = vmatprep.subr.bf16.mxu0 0
        %386 = vmatpush1.bf16.msra.mxu0 %v342
        %387 = vmatprep.subr.bf16.mxu0 0
        %388 = vmatpush1.bf16.msra.mxu0 %v343
        %389 = vmatprep.subr.bf16.mxu0 0
        %390 = vmatpush1.bf16.msra.mxu0 %v344
        %391 = vmatprep.subr.bf16.mxu0 0
        %392 = vmatpush1.bf16.msra.mxu0 %v345
        %393 = vmatprep.subr.bf16.mxu0 0
        %394 = vmatpush1.bf16.msra.mxu0 %v346
        %395 = vmatprep.mubr.bf16.mxu0 %v264
        %396 = vmatmul.mubr.bf16.gmra.mrb[0].mxu0 %v263
        %v397 = vpop.f32.mrb[0].mxu0
        %v398 = vadd.f32 0.0, %v397
        %v399 = vpop.f32.mrb[0].mxu0
        %v400 = vpop.f32.mrb[0].mxu0
        %v401 = vpop.f32.mrb[0].mxu0
        %402 = vdwg.mxu0
        %v403 = vadd.f32 %v222, %v398
        %vm404 = vcmask 519168
        %405 = vst.msk [vmem:[%s194] sm:$0xf] %vm404, %v403
        %s406 = sand.u32 %s103, 1
        %s407 = scalar_lea.sflag [#allocation3], %s406
        %s408 = sand.u32 %s103, 1
        %s409 = smul.addr %s408, 4
        %s410 = scalar_lea.vmem [#allocation2], %s409
        // Predicated region
        $region33: #{tpu_custom_call.1} parent=27 // pred_check
          %p411 = pneg %p113
        $region34: #{tpu_custom_call.1} parent=27 // pred_check_branch
          %413 = sbr.rel (%p411) target = $region36
        $region35: #{tpu_custom_call.1} parent=27 // pred_region
          %s415 = ssub.s32 64, 64
          %416 = vsyncadd %s407, %s415
          %s417 = smul.addr %s21, 2
          %s418 = sadd.s32 %s22, %s417
          %s419 = smul.addr %s418, 64
          %s420 = scalar_lea.hbm %s2, %s419
          %s422 = sshll.u32 %s410, 4
          %s423 = int_to_ptr.vmem [resolvable:$true] %s422
          %425 = dma.vmem_to_hbm [thread:$0]  %s423, 64, %s420, %s407
        $region36: #{tpu_custom_call.1} parent=27 // pred_fallthru
          _
      $region28: #{tpu_custom_call.1} parent=5 // pred_fallthru
        _
      %p426 = scmp.le.s32.totalorder 2, %s11
      // Predicated region
      $region37: #{tpu_custom_call.1} parent=5 // pred_check
        %p427 = pneg %p426
      $region38: #{tpu_custom_call.1} parent=5 // pred_check_branch
        %429 = sbr.rel (%p427) target = $region40
      $region39: #{tpu_custom_call.1} parent=5 // pred_region
        %s430 = ssub.s32 %s11, 2
        // Predicated region
        $region41: #{tpu_custom_call.1} parent=39 // pred_check
          %p431 = pneg %p119
        $region42: #{tpu_custom_call.1} parent=39 // pred_check_branch
          %433 = sbr.rel (%p431) target = $region44
        $region43: #{tpu_custom_call.1} parent=39 // pred_region
          %s434 = sand.u32 %s104, 1
          %s435 = scalar_lea.sflag [#allocation3], %s434
          %s436 = sand.u32 %s104, 1
          %s437 = smul.addr %s436, 4
          %s438 = scalar_lea.vmem [#allocation2], %s437
          %439 = dma.done %s435, 64
        $region44: #{tpu_custom_call.1} parent=39 // pred_fallthru
          _
      $region40: #{tpu_custom_call.1} parent=5 // pred_fallthru
        _
    $region6: #{tpu_custom_call.1} parent=1 // loop_footer
      %s15 = sadd.s32 1, %s11
    $region7: #{tpu_custom_call.1} parent=1 // loop_footer_branch
      %10 = sbr.rel target = $region3
    $region8: #{tpu_custom_call.1} parent=1 // loop_exit
      _
    %440 = vsyncpa [#allocation3], 1
    %s441 = scalar_lea.sflag [#allocation3], 1
    %442 = vsyncpa %s441, 1

</llo_original>
